<compile_context>
chip_gen: v7x
topology: tpu7x:2x2x1
jax: 0.10.0
libtpu: 0.0.40
codegen_flags: <defaults>
</compile_context>

<pallas_src>
import jax
import jax.numpy as jnp
from jax.experimental import pallas as pl
from jax.experimental.pallas import tpu as pltpu


def _round_up(a, b):
    return (a + b - 1) // b * b


# -----------------------------------------------------------------------------
# Fused fast path: whole (folded) feature map resident in VMEM, single call.
# -----------------------------------------------------------------------------
def _make_fused_kernel(fold, d):
    lanes = fold * d

    def kernel(x_ref, gamma_ref, beta_ref, out_ref):
        xf = x_ref[...].astype(jnp.float32)
        lane_ss = jnp.sum(xf * xf, axis=0, keepdims=True)        # (1, lanes)
        # Fold-sum: per-channel sum of squares, replicated across fold groups.
        # fold is a power of two, so log2(fold) lane rotations (XLU) suffice.
        total = lane_ss
        step = d
        while step < lanes:
            total = total + pltpu.roll(total, step, axis=1)
            step *= 2
        gx = jnp.sqrt(total)                                      # ||.||_2 per channel
        mean_gx = jnp.mean(gx, axis=-1, keepdims=True)            # == mean over channels
        scale = gamma_ref[...] * (gx / (mean_gx + 1e-6)) + 1.0    # gamma * Nx + 1
        out_ref[...] = (xf * scale + beta_ref[...]).astype(out_ref.dtype)

    return kernel


# -----------------------------------------------------------------------------
# Streamed pass 1: per-lane sum of squares, one resident accumulator per core.
# -----------------------------------------------------------------------------
def _make_reduce_kernel(tn, nf, need_mask):
    def kernel(x_ref, acc_ref):
        @pl.when(pl.program_id(1) == 0)
        def _init():
            acc_ref[...] = jnp.zeros_like(acc_ref)

        x = x_ref[...].astype(jnp.float32)
        if need_mask:
            # Mask rows past the logical end (no jnp.pad of x in HBM needed).
            start = (pl.program_id(0) * pl.num_programs(1) + pl.program_id(1)) * tn
            rows = start + jax.lax.broadcasted_iota(jnp.int32, x.shape, 0)
            x = jnp.where(rows < nf, x, 0.0)
        # (1, lanes) partial sum broadcast across the 8-sublane accumulator
        # block (every sublane holds the same running per-core total).
        acc_ref[...] += jnp.sum(x * x, axis=0, keepdims=True)

    return kernel


# -----------------------------------------------------------------------------
# Streamed pass 2: out = x * scale + beta  (f32 math, cast on store).
# -----------------------------------------------------------------------------
def _grn_apply_kernel(scale_ref, beta_ref, x_ref, out_ref):
    out_ref[...] = (x_ref[...].astype(jnp.float32) * scale_ref[...]
                    + beta_ref[...]).astype(out_ref.dtype)


def minkowski_grn(x, gamma, beta, *, row_tile=None, force_streamed=False,
                  donate_input=False):
    """GRN over sparse-tensor features.  x: (N, D); gamma/beta: (1, D)."""
    N, D = x.shape
    orig_dtype = x.dtype
    itemsize = jnp.dtype(orig_dtype).itemsize

    if N == 0:
        return jnp.zeros_like(x)

    gamma32 = jnp.asarray(gamma, jnp.float32).reshape(1, D)
    beta32 = jnp.asarray(beta, jnp.float32).reshape(1, D)

    # ---- lane-dense folding (zero-copy): pack 128 // D rows into the lanes --
    fold = 128 // D if (D <= 128 and 128 % D == 0 and N % (128 // D) == 0) else 1
    # TODO(synk): for 128 % D != 0 (e.g. D=48/96) or ragged N % fold != 0 we
    # fall back to lanes=D (masked stores) rather than add a padding copy.
    lanes = fold * D
    nf = N // fold
    x_f = x.reshape(nf, lanes)                        # pure row-major reshape (free)

    gamma_t = jnp.tile(gamma32, (1, fold))            # (1, lanes) f32
    beta_t = jnp.tile(beta32, (1, fold))              # (1, lanes) f32

    # ---- fused single-call path when x comfortably fits in VMEM -------------
    # working set ~ in + out + ~2x f32 temporaries of the feature map
    fused_working = nf * lanes * (2 * itemsize + 8)
    if not force_streamed and fused_working <= (32 << 20):
        out_f = pl.pallas_call(
            _make_fused_kernel(fold, D),
            out_shape=jax.ShapeDtypeStruct((nf, lanes), orig_dtype),
            in_specs=[pl.BlockSpec(memory_space=pltpu.MemorySpace.VMEM)] * 3,
            out_specs=pl.BlockSpec(memory_space=pltpu.MemorySpace.VMEM),
            input_output_aliases=({0: 0} if donate_input else {}),
            compiler_params=pltpu.CompilerParams(
                vmem_limit_bytes=40 * 1024 * 1024),
        )(x_f, gamma_t, beta_t)
        return out_f.reshape(N, D)

    # ---- streamed two-pass path ----------------------------------------------
    packing = max(8, 32 // itemsize)                  # 8 rows f32, 16 bf16, 32 int8
    if row_tile is None:
        target_tile_bytes = 4 << 20                   # ~4 MiB per x tile
        tn = (target_tile_bytes // (lanes * itemsize)) // packing * packing
    else:
        tn = _round_up(row_tile, packing)
    tn = max(packing, min(tn, _round_up(nf, packing)))
    num_tiles = pl.cdiv(nf, tn)
    tpc = pl.cdiv(num_tiles, 2)                       # reduce tiles per core (v7x 2-TC)
    need_mask = (2 * tpc * tn) != nf
    vmem_limit = 32 * 1024 * 1024                     # > v5e's 16 MiB scoped default,
                                                      # safe headroom on v7x's 64 MiB

    # pass 1: streamed global reduction, split over two per-core accumulators.
    partials = pl.pallas_call(
        _make_reduce_kernel(tn, nf, need_mask),
        out_shape=jax.ShapeDtypeStruct((16, lanes), jnp.float32),  # 2 cores x 8 rows
        grid=(2, tpc),
        in_specs=[pl.BlockSpec(
            (tn, lanes),
            # clamp so a fully-out-of-range tile index never reaches the DMA;
            # its contribution is zeroed by the in-kernel row mask.
            lambda c, i: (jnp.minimum(c * tpc + i, num_tiles - 1), 0))],
        out_specs=pl.BlockSpec((8, lanes), lambda c, i: (c, 0)),
        compiler_params=pltpu.CompilerParams(
            dimension_semantics=("parallel", "arbitrary"),
            vmem_limit_bytes=vmem_limit),
        cost_estimate=pl.CostEstimate(
            flops=3 * nf * lanes, transcendentals=0,
            bytes_accessed=nf * lanes * itemsize + 16 * lanes * 4),
    )(x_f)

    # tiny (1, D) epilogue in plain JAX (negligible work)
    sumsq_lane = partials[0:1, :] + partials[8:9, :]                       # (1, lanes)
    sumsq = jnp.sum(sumsq_lane.reshape(fold, D), axis=0, keepdims=True)    # (1, D)
    gx = jnp.sqrt(sumsq)                                                   # per-channel L2
    nx = gx / (jnp.mean(gx, axis=-1, keepdims=True) + 1e-6)
    scale_t = jnp.tile(gamma32 * nx + 1.0, (1, fold))                      # (1, lanes) f32

    # pass 2: lane-dense streamed apply; ragged tail rows are simply never
    # written (OOB writes of the last tile are discarded), so there is no
    # jnp.pad before the kernels and no [:N] slice copy afterwards.
    out_f = pl.pallas_call(
        _grn_apply_kernel,
        out_shape=jax.ShapeDtypeStruct((nf, lanes), orig_dtype),
        grid=(num_tiles,),
        in_specs=[
            pl.BlockSpec((1, lanes), lambda i: (0, 0)),     # scale (f32, broadcast)
            pl.BlockSpec((1, lanes), lambda i: (0, 0)),     # beta  (f32, broadcast)
            pl.BlockSpec((tn, lanes), lambda i: (i, 0)),    # x tile
        ],
        out_specs=pl.BlockSpec((tn, lanes), lambda i: (i, 0)),
        input_output_aliases=({2: 0} if donate_input else {}),
        compiler_params=pltpu.CompilerParams(
            dimension_semantics=("parallel",),
            vmem_limit_bytes=vmem_limit),
        cost_estimate=pl.CostEstimate(
            flops=2 * nf * lanes, transcendentals=0,
            bytes_accessed=2 * nf * lanes * itemsize + 2 * lanes * 4),
    )(scale_t, beta_t, x_f)

    return out_f.reshape(N, D)


def _reference(x, gamma, beta):
    xf = x.astype(jnp.float32)
    gx = jnp.sqrt(jnp.sum(xf * xf, axis=0, keepdims=True))
    nx = gx / (jnp.mean(gx, axis=-1, keepdims=True) + 1e-6)
    out = gamma.astype(jnp.float32) * (xf * nx) + beta.astype(jnp.float32) + xf
    return out.astype(x.dtype)


if __name__ == "__main__":
    key = jax.random.PRNGKey(0)
    k1, k2, k3, k4 = jax.random.split(key, 4)

    def check(x, gamma, beta, tol, **kw):
        out = jax.block_until_ready(minkowski_grn(x, gamma, beta, **kw))
        ref = _reference(x, gamma, beta)
        assert out.shape == x.shape and out.dtype == x.dtype
        assert jnp.allclose(out.astype(jnp.float32), ref.astype(jnp.float32),
                            atol=tol, rtol=tol), "mismatch vs reference"

    # Small deterministic parameters (module init is zeros; use nonzero values
    # so the GRN math path is actually exercised).
    gamma = 0.1 * jax.random.normal(k2, (1, 32), dtype=jnp.float32)
    beta = 0.1 * jax.random.normal(k3, (1, 32), dtype=jnp.float32)

    # 1) fused fast path, folded lane-dense layout (N=256, D=32, f32)
    x1 = jax.random.normal(k1, (256, 32), dtype=jnp.float32)
    check(x1, gamma, beta, 1e-5)

    # 2) streamed two-pass path, folded, ragged last tile + 2-core reduce split
    x2 = jax.random.normal(k4, (300, 32), dtype=jnp.float32)
    check(x2, gamma, beta, 1e-5, force_streamed=True, row_tile=64)

    # 3) streamed path, non-folding channel count (lanes = D = 48)
    x3 = jax.random.normal(k1, (200, 48), dtype=jnp.float32)
    g3 = 0.1 * jax.random.normal(k2, (1, 48), dtype=jnp.float32)
    b3 = 0.1 * jax.random.normal(k3, (1, 48), dtype=jnp.float32)
    check(x3, g3, b3, 1e-5, force_streamed=True, row_tile=64)

    # 4) fused path without folding (D=48)
    x4 = jax.random.normal(k4, (64, 48), dtype=jnp.float32)
    check(x4, g3, b3, 1e-5)

    # 5) bf16 features: f32 accumulation & scale/beta, bf16 store (streamed)
    x5 = jax.random.normal(k4, (1024, 64), dtype=jnp.bfloat16)
    g5 = 0.1 * jax.random.normal(k2, (1, 64), dtype=jnp.float32)
    b5 = 0.1 * jax.random.normal(k3, (1, 64), dtype=jnp.float32)
    check(x5, g5, b5, 5e-2, force_streamed=True, row_tile=128)

    print("KERNEL_OK")
</pallas_src>

<mosaic_0001>
module attributes {stable_mosaic.version = 11 : i64} {
  func.func @kernel(%arg0: memref<64x128xf32, #tpu.memory_space<vmem>>, %arg1: memref<1x128xf32, #tpu.memory_space<vmem>>, %arg2: memref<1x128xf32, #tpu.memory_space<vmem>>, %arg3: memref<64x128xf32, #tpu.memory_space<vmem>>) attributes {dimension_semantics = [], scalar_prefetch = 0 : i64, scratch_operands = 0 : i64, tpu.core_type = #tpu.core_type<tc>} {
    %c0 = arith.constant 0 : index
    %c0_0 = arith.constant 0 : index
    %0 = vector.load %arg0[%c0, %c0_0] : memref<64x128xf32, #tpu.memory_space<vmem>>, vector<64x128xf32>
    %1 = arith.mulf %0, %0 : vector<64x128xf32>
    %cst = arith.constant dense<0.000000e+00> : vector<128xf32>
    %2 = vector.multi_reduction <add>, %1, %cst [0] : vector<64x128xf32> to vector<128xf32>
    %3 = vector.shape_cast %2 : vector<128xf32> to vector<1x128xf32>
    %c32_i32 = arith.constant 32 : i32
    %4 = tpu.dynamic_rotate %3 by %c32_i32 dim 1 : vector<1x128xf32>, i32 -> vector<1x128xf32>
    %5 = arith.addf %3, %4 : vector<1x128xf32>
    %c64_i32 = arith.constant 64 : i32
    %6 = tpu.dynamic_rotate %5 by %c64_i32 dim 1 : vector<1x128xf32>, i32 -> vector<1x128xf32>
    %7 = arith.addf %5, %6 : vector<1x128xf32>
    %8 = math.sqrt %7 : vector<1x128xf32>
    %cst_1 = arith.constant dense<0.000000e+00> : vector<1xf32>
    %9 = vector.multi_reduction <add>, %8, %cst_1 [1] : vector<1x128xf32> to vector<1xf32>
    %10 = vector.shape_cast %9 : vector<1xf32> to vector<1x1xf32>
    %cst_2 = arith.constant 1.280000e+02 : f32
    %11 = vector.broadcast %cst_2 : f32 to vector<1x1xf32>
    %12 = arith.divf %10, %11 : vector<1x1xf32>
    %c0_3 = arith.constant 0 : index
    %c0_4 = arith.constant 0 : index
    %13 = vector.load %arg1[%c0_3, %c0_4] : memref<1x128xf32, #tpu.memory_space<vmem>>, vector<1x128xf32>
    %cst_5 = arith.constant 9.99999997E-7 : f32
    %14 = vector.broadcast %cst_5 : f32 to vector<1x1xf32>
    %15 = arith.addf %12, %14 : vector<1x1xf32>
    %16 = vector.broadcast %15 : vector<1x1xf32> to vector<1x128xf32>
    %17 = arith.divf %8, %16 : vector<1x128xf32>
    %18 = arith.mulf %13, %17 : vector<1x128xf32>
    %cst_6 = arith.constant 1.000000e+00 : f32
    %19 = vector.broadcast %cst_6 : f32 to vector<1x128xf32>
    %20 = arith.addf %18, %19 : vector<1x128xf32>
    %21 = vector.broadcast %20 : vector<1x128xf32> to vector<64x128xf32>
    %22 = arith.mulf %0, %21 : vector<64x128xf32>
    %c0_7 = arith.constant 0 : index
    %c0_8 = arith.constant 0 : index
    %23 = vector.load %arg2[%c0_7, %c0_8] : memref<1x128xf32, #tpu.memory_space<vmem>>, vector<1x128xf32>
    %24 = vector.broadcast %23 : vector<1x128xf32> to vector<64x128xf32>
    %25 = arith.addf %22, %24 : vector<64x128xf32>
    %c0_9 = arith.constant 0 : index
    %c0_10 = arith.constant 0 : index
    %26 = vector.load %arg3[%c0_9, %c0_10] : memref<64x128xf32, #tpu.memory_space<vmem>>, vector<64x128xf32>
    tpu.vector_store %arg3[%c0_9, %c0_10], %25 {strides = array<i32>} : memref<64x128xf32, #tpu.memory_space<vmem>>, vector<64x128xf32>,
    return
  }
}

</mosaic_0001>

<llo_original>
// kernel: tpu_custom_call.1
$region0: #{tpu_custom_call.1}
  #allocation0 [shape = 'u32[]', space=smem, size = 0x4, offset = 0x4, fixed_abs, tag = 'smem constant byte address 0x4 - core index']
  #allocation1 [shape = 'u32[144,128]{1,0:T(1,128)}', space=vmem, size = 0x12000, scoped, tag = 'internal scratch']
  %s0 = inlined_call_operand.hbm [shape: f32[64,128], index: 0, kind: input, shape index: {}]
  %s1 = inlined_call_operand.vmem [shape: f32[1,128], index: 1, kind: input, shape index: {}]
  %s2 = inlined_call_operand.vmem [shape: f32[1,128], index: 2, kind: input, shape index: {}]
  %s3 = inlined_call_operand.hbm [shape: f32[64,128], index: 3, kind: output, shape index: {}]
  %s4 = sld [smem:[#allocation0]]
  $region26: #{tpu_custom_call.1} parent=0
    _
  %s6 = ssub.s32 1, %s4
  %s7 = scalar_select 0, %s6, %s4
  $region1: #{tpu_custom_call.1} parent=0
    #allocation2 [shape = 'u8[32768]{0}', space=vmem, size = 0x8000, scoped, tag = 'input window, operand 0, single buffered']
    #allocation3 [shape = 's32[1]{0}', space=sflag, size = 0x4, scoped, tag = 'scoped memory for tpu_custom_call.1']
    #allocation4 [shape = 's32[1]{0}', space=sflag, size = 0x4, scoped, tag = 'scoped memory for tpu_custom_call.1']
    #allocation5 [shape = 'u8[32768]{0}', space=vmem, size = 0x8000, scoped, tag = 'output window, operand 0, single buffered']
    %8 = vsyncpa [#allocation3], 0
    %9 = vsyncpa [#allocation4], 0
    // Predicated region
    $region2: #{tpu_custom_call.1} parent=1 // pred_check
      _
    $region3: #{tpu_custom_call.1} parent=1 // pred_check_branch
      %11 = sbr.rel (0) target = $region5
    $region4: #{tpu_custom_call.1} parent=1 // pred_region
      %s13 = ssub.s32 1024, 1024
      %14 = vsyncadd [#allocation3], %s13
      %s15 = sshll.u32 [#allocation2], 4
      %s16 = int_to_ptr.vmem [resolvable:$true] %s15
      %21 = dma.hbm_to_vmem [thread:$0]  %s0, 1024, %s16, [#allocation3], 128, 128, 8
    $region5: #{tpu_custom_call.1} parent=1 // pred_fallthru
      _
    // Predicated region
    $region6: #{tpu_custom_call.1} parent=1 // pred_check
      _
    $region7: #{tpu_custom_call.1} parent=1 // pred_check_branch
      %23 = sbr.rel (0) target = $region9
    $region8: #{tpu_custom_call.1} parent=1 // pred_region
      _
    $region9: #{tpu_custom_call.1} parent=1 // pred_fallthru
      _
    // Predicated region
    $region10: #{tpu_custom_call.1} parent=1 // pred_check
      _
    $region11: #{tpu_custom_call.1} parent=1 // pred_check_branch
      %25 = sbr.rel (0) target = $region13
    $region12: #{tpu_custom_call.1} parent=1 // pred_region
      _
    $region13: #{tpu_custom_call.1} parent=1 // pred_fallthru
      _
    // Predicated region
    $region14: #{tpu_custom_call.1} parent=1 // pred_check
      _
    $region15: #{tpu_custom_call.1} parent=1 // pred_check_branch
      %27 = sbr.rel (0) target = $region17
    $region16: #{tpu_custom_call.1} parent=1 // pred_region
      %28 = dma.done [#allocation3], 1024
    $region17: #{tpu_custom_call.1} parent=1 // pred_fallthru
      _
    %v29 = vld [vmem:[#allocation2] sm:$0xff]
    %v30 = vld [vmem:[#allocation2 + $0x8] sm:$0xff]
    %v31 = vld [vmem:[#allocation2 + $0x10] sm:$0xff]
    %v32 = vld [vmem:[#allocation2 + $0x18] sm:$0xff]
    %v33 = vld [vmem:[#allocation2 + $0x20] sm:$0xff]
    %v34 = vld [vmem:[#allocation2 + $0x28] sm:$0xff]
    %v35 = vld [vmem:[#allocation2 + $0x30] sm:$0xff]
    %v36 = vld [vmem:[#allocation2 + $0x38] sm:$0xff]
    %v37 = vmul.f32 %v29, %v29
    %v38 = vmul.f32 %v30, %v30
    %v39 = vmul.f32 %v31, %v31
    %v40 = vmul.f32 %v32, %v32
    %v41 = vmul.f32 %v33, %v33
    %v42 = vmul.f32 %v34, %v34
    %v43 = vmul.f32 %v35, %v35
    %v44 = vmul.f32 %v36, %v36
    %v45 = vadd.f32 %v37, %v38
    %v46 = vadd.f32 %v45, %v39
    %v47 = vadd.f32 %v46, %v40
    %v48 = vadd.f32 %v47, %v41
    %v49 = vadd.f32 %v48, %v42
    %v50 = vadd.f32 %v49, %v43
    %v51 = vadd.f32 %v50, %v44
    %v52 = vrot.slane %v51, 4
    %v53 = vadd.f32 %v51, %v52
    %v54 = vrot.slane %v53, 2
    %v55 = vadd.f32 %v53, %v54
    %v56 = vrot.slane %v55, 1
    %v57 = vadd.f32 %v55, %v56
    %58 = vrot.lane.b32.xlu0 %v57, 32
    %v59 = vpop.permute.xlu0 %58
    %v60 = vadd.f32 %v57, %v59
    %61 = vrot.lane.b32.xlu0 %v60, 64
    %v62 = vpop.permute.xlu0 %61
    %v63 = vadd.f32 %v60, %v62
    %v64 = vrsqrt.pop %v63
    %v65 = vmul.f32 %v63, %v64
    %vm66 = vcmp.eq.f32.partialorder %v63, inf
    %v67 = vsel %vm66, %v63, %v65
    %vm68 = vcmp.eq.f32.partialorder %v63, 0.0
    %v69 = vand.u32 %v63, 2147483648
    %v70 = vsel %vm68, %v69, %v67
    %vm71 = vcmask 1040384
    %v72 = vsel %vm71, %v70, 0.0
    %73 = vadd.xlane.f32.xlu0 %v72
    %v74 = vpop.xlane.xlu0 %73
    %v75 = vrcp.pop 128.0
    %v76 = vmul.f32 %v74, %v75
    %v77 = vld [vmem:[%s1] sm:$0x1]
    %v78 = vadd.f32 %v76, 1e-06
    %v79 = vrcp.pop %v78
    %v80 = vmul.f32 %v70, %v79
    %v81 = vmul.f32 %v77, %v80
    %v82 = vadd.f32 %v81, 1.0
    %v84 = vlaneseq
    %v85 = vshrl.u32 %v84, 7
    %v86 = vsub.s32 0, %v85
    %v87 = vrot.slane %v82, %v86
    %v89 = vmul.f32 %v29, %v87
    %v90 = vmul.f32 %v30, %v87
    %v91 = vmul.f32 %v31, %v87
    %v92 = vmul.f32 %v32, %v87
    %v93 = vmul.f32 %v33, %v87
    %v94 = vmul.f32 %v34, %v87
    %v95 = vmul.f32 %v35, %v87
    %v96 = vmul.f32 %v36, %v87
    %v97 = vld [vmem:[%s2] sm:$0x1]
    %v99 = vlaneseq
    %v100 = vshrl.u32 %v99, 7
    %v101 = vsub.s32 0, %v100
    %v102 = vrot.slane %v97, %v101
    %v104 = vadd.f32 %v89, %v102
    %v105 = vadd.f32 %v90, %v102
    %v106 = vadd.f32 %v91, %v102
    %v107 = vadd.f32 %v92, %v102
    %v108 = vadd.f32 %v93, %v102
    %v109 = vadd.f32 %v94, %v102
    %v110 = vadd.f32 %v95, %v102
    %v111 = vadd.f32 %v96, %v102
    %112 = vst [vmem:[#allocation5] sm:$0xff] %v104
    %113 = vst [vmem:[#allocation5 + $0x8] sm:$0xff] %v105
    %114 = vst [vmem:[#allocation5 + $0x10] sm:$0xff] %v106
    %115 = vst [vmem:[#allocation5 + $0x18] sm:$0xff] %v107
    %116 = vst [vmem:[#allocation5 + $0x20] sm:$0xff] %v108
    %117 = vst [vmem:[#allocation5 + $0x28] sm:$0xff] %v109
    %118 = vst [vmem:[#allocation5 + $0x30] sm:$0xff] %v110
    %119 = vst [vmem:[#allocation5 + $0x38] sm:$0xff] %v111
    // Predicated region
    $region18: #{tpu_custom_call.1} parent=1 // pred_check
      _
    $region19: #{tpu_custom_call.1} parent=1 // pred_check_branch
      %121 = sbr.rel (0) target = $region21
    $region20: #{tpu_custom_call.1} parent=1 // pred_region
      %s123 = ssub.s32 1024, 1024
      %124 = vsyncadd [#allocation4], %s123
      %s125 = sshll.u32 [#allocation5], 4
      %s126 = int_to_ptr.vmem [resolvable:$true] %s125
      %131 = dma.vmem_to_hbm [thread:$0]  %s126, 1024, %s3, [#allocation4], 128, 128, 8
    $region21: #{tpu_custom_call.1} parent=1 // pred_fallthru
      _
    // Predicated region
    $region22: #{tpu_custom_call.1} parent=1 // pred_check
      _
    $region23: #{tpu_custom_call.1} parent=1 // pred_check_branch
      %133 = sbr.rel (0) target = $region25
    $region24: #{tpu_custom_call.1} parent=1 // pred_region
      %134 = dma.done [#allocation4], 1024
    $region25: #{tpu_custom_call.1} parent=1 // pred_fallthru
      _
    %135 = vsyncpa [#allocation3], 1
    %136 = vsyncpa [#allocation4], 1

</llo_original>
